<compile_context>
chip_gen: v6e
topology: v6e:2x2x1
jax: 0.10.0
libtpu: 0.0.40
codegen_flags: <defaults>
</compile_context>

<pallas_src>
import numpy as np
import jax
import jax.numpy as jnp
from jax.experimental import pallas as pl
from jax.experimental.pallas import tpu as pltpu

# ------------------------------------------------------------------
# scheduler / module constants (from DeepFloyd_IF.__init__)
# ------------------------------------------------------------------
NUM_TRAIN_TIMESTEPS = 1000
T_RANGE = (0.02, 0.98)
OUT_HW = 64  # F.interpolate target resolution for IF stage-I


def make_alphas_cumprod(n=NUM_TRAIN_TIMESTEPS):
    # deterministic DDPM-style linear beta schedule -> alphas_cumprod (n,)
    betas = np.linspace(1e-4, 0.02, n, dtype=np.float64)
    return jnp.asarray(np.cumprod(1.0 - betas), dtype=jnp.float32)


def bilinear_matrix(out_size, in_size):
    # F.interpolate(mode='bilinear', align_corners=False) as a dense (out, in) matrix
    scale = in_size / out_size
    i = np.arange(out_size, dtype=np.float64)
    src = np.maximum((i + 0.5) * scale - 0.5, 0.0)
    i0 = np.minimum(np.floor(src).astype(np.int64), in_size - 1)
    i1 = np.minimum(i0 + 1, in_size - 1)
    frac = src - i0
    M = np.zeros((out_size, in_size), dtype=np.float32)
    M[np.arange(out_size), i0] += (1.0 - frac)
    M[np.arange(out_size), i1] += frac
    return M


# ------------------------------------------------------------------
# Fused kernel: (mix+resize) -> add_noise -> surrogate UNet -> CFG -> SDS grad -> nan_to_num
# ------------------------------------------------------------------
def _make_kernel(B, C, O):
    BO = B * O  # lanes per output-channel block (128 for B=2)

    def kernel(sc_ref, wn_ref, bias_ref, x1_ref, r1_ref, lh_ref, n_ref, o_ref):
        s_img = sc_ref[0]   # sqrt(alpha_cum) * grad_scale * (1 - alpha_cum)
        s_mix = sc_ref[1]   # sqrt(1 - alpha_cum) * gw   (applied to wn @ noise)
        s_noi = sc_ref[2]   # gw                         (applied to -noise)
        fmax = jnp.finfo(jnp.float32).max

        # (1) channel-mix + bilinear column pass for the WHOLE batch: one wide MXU matmul.
        #     x1: (H, B*C*W) bf16, r1: (B*C*W, C*B*O) bf16, block-diagonal over batch.
        m1 = jnp.dot(x1_ref[...], r1_ref[...], preferred_element_type=jnp.float32)  # (H, C*B*O)

        # (2) bilinear row pass, batched over (channel, batch): one wide MXU matmul that
        #     directly emits the lane-dense (O, C*B*O) slab. Scalar s_img fused into the cast.
        rhs = (s_img * m1).astype(jnp.bfloat16)                                     # (H, C*B*O)
        res = jnp.dot(lh_ref[...], rhs, preferred_element_type=jnp.float32)         # (O, C*B*O)

        # (3) epilogue per 128-lane-aligned channel block: surrogate-UNet noise mix
        #     (sb*wn - I on the noise channels), hoisted CFG text bias, SDS grad,
        #     nan_to_num. Noise is re-read from VMEM per use to keep vreg pressure low;
        #     every store is a full-width, lane-aligned vst.
        for co in range(C):
            lo = co * BO
            mix = wn_ref[co, 0] * n_ref[:, 0:BO]
            for ci in range(1, C):
                mix = mix + wn_ref[co, ci] * n_ref[:, ci * BO:(ci + 1) * BO]
            g = (res[:, lo:lo + BO]
                 + s_mix * mix
                 - s_noi * n_ref[:, lo:lo + BO]
                 + bias_ref[:, lo:lo + BO])
            g = jnp.where(jnp.isnan(g), jnp.float32(0.0), g)      # torch.nan_to_num
            o_ref[:, lo:lo + BO] = jnp.clip(g, -fmax, fmax)

    return kernel


def _fused_sds_grad(sc, wn, bias, x1, r1bd, lh, nslab, *, B, C, O):
    """sc   : (4,)            f32  [sqrt_ac*gw, sqrt_1m_ac*gw, gw, 0]          (SMEM)
       wn   : (C, C)          f32  surrogate-UNet channel-mix (noise head)     (SMEM)
       bias : (1, C*B*O)      f32  gw * eff_ctx laid out per lane              (VMEM)
       x1   : (H, B*C*W)      bf16 image, columns ordered (b, ci, w)
       r1bd : (B*C*W, C*B*O)  bf16 fused channel-mix x column-interp (block-diag over b)
       lh   : (O, H)          bf16 row-interp matrix
       nslab: (O, C*B*O)      f32  noise in slab layout, columns (co, b, o2)
       returns grad slab (O, C*B*O) f32, columns (co, b, o2)
    """
    smem = pltpu.MemorySpace.SMEM
    vmem = pltpu.MemorySpace.VMEM
    return pl.pallas_call(
        _make_kernel(B, C, O),
        out_shape=jax.ShapeDtypeStruct((O, C * B * O), jnp.float32),
        in_specs=[
            pl.BlockSpec(memory_space=smem),   # sc
            pl.BlockSpec(memory_space=smem),   # wn
            pl.BlockSpec(memory_space=vmem),   # bias
            pl.BlockSpec(memory_space=vmem),   # x1
            pl.BlockSpec(memory_space=vmem),   # r1bd
            pl.BlockSpec(memory_space=vmem),   # lh
            pl.BlockSpec(memory_space=vmem),   # noise slab
        ],
        out_specs=pl.BlockSpec(memory_space=vmem),
    )(sc, wn, bias, x1, r1bd, lh, nslab)


# ------------------------------------------------------------------
# Module wrapper (mirrors DeepFloyd_IF.train_step semantics)
# ------------------------------------------------------------------
class DeepFloydIFGuidance:
    def __init__(self, key, in_channels=3, text_hidden=32):
        self.num_train_timesteps = NUM_TRAIN_TIMESTEPS
        self.min_step = int(self.num_train_timesteps * T_RANGE[0])
        self.max_step = int(self.num_train_timesteps * T_RANGE[1])
        self.alphas = make_alphas_cumprod()          # alphas_cumprod, shape (1000,)
        k1, k2 = jax.random.split(key)
        # Surrogate UNet keeps IF-I-XL's (C -> 2C) output contract; rows [C:] are the
        # predicted-variance head, never consumed by train_step, so only rows [:C]
        # enter the fused kernel.
        self.w_unet = 0.1 * jax.random.normal(k1, (2 * in_channels, in_channels), jnp.float32)
        self.w_txt = 0.05 * jax.random.normal(k2, (2 * in_channels, text_hidden), jnp.float32)
        self._const_cache = {}
        self._train_step = jax.jit(self._train_step_impl)

    def _consts(self, B, C, H, W):
        # Host-built (numpy), cached, fixed matmul operands: fused channel-mix x column
        # interp (block-diagonal over batch) and the row-interp matrix.
        k = (B, C, H, W)
        if k not in self._const_cache:
            O = OUT_HW
            wn = np.asarray(self.w_unet)[:C, :]          # (C_out, C_in) noise head
            lw = bilinear_matrix(O, W)                   # (O, W) column interp
            lh = bilinear_matrix(O, H)                   # (O, H) row interp
            # r1bd[(b,ci,w), (co,b2,o2)] = delta(b,b2) * wn[co,ci] * lw[o2,w]
            r1 = np.einsum('oc,kw->cwok', wn, lw).reshape(C * W, C, O)
            r1bd = np.zeros((B, C * W, C, B, O), np.float32)
            for b in range(B):
                r1bd[b, :, :, b, :] = r1
            r1bd = r1bd.reshape(B * C * W, C * B * O)
            self._const_cache[k] = (jnp.asarray(r1bd, jnp.bfloat16),
                                    jnp.asarray(lh, jnp.bfloat16))
        return self._const_cache[k]

    def _train_step_impl(self, key, text_embeddings, pred_rgb,
                         guidance_scale, grad_scale, r1bd, lh):
        # text_embeddings: (2B, S, Hd) = [uncond; cond], pred_rgb: (B, C, H, W)
        B, C, H, W = pred_rgb.shape
        O = OUT_HW

        kt, kn = jax.random.split(key)
        t = jax.random.randint(kt, (1,), self.min_step, self.max_step + 1)
        # noise ~ randn_like(pred_rgb_64), drawn directly in the kernel's lane-dense slab
        # layout (O, C*B*O), column order (channel, batch, o2) -> statistically identical.
        nslab = jax.random.normal(kn, (O, C * B * O), jnp.float32)

        ac = self.alphas[t[0]]
        w = 1.0 - ac
        gw = grad_scale * w
        sa = jnp.sqrt(ac)
        sb = jnp.sqrt(1.0 - ac)
        sc = jnp.stack([sa * gw, sb * gw, gw, jnp.float32(0.0)]).astype(jnp.float32)

        wn = self.w_unet[:C, :].astype(jnp.float32)   # noise head of the 1x1 conv

        # Hoisted (tiny) text-context + timestep bias with CFG already applied (eff_ctx),
        # laid out as one per-lane bias row matching the output slab columns (co, b, o2).
        emb_mean = jnp.mean(text_embeddings.astype(jnp.float32), axis=1)        # (2B, Hd)
        ctx = emb_mean @ self.w_txt[:C].T + 1e-3 * t[0].astype(jnp.float32)     # (2B, C)
        eff = ctx[:B] + guidance_scale * (ctx[B:] - ctx[:B])                    # (B, C)
        bias = jnp.broadcast_to((gw * eff).T[:, :, None], (C, B, O)).reshape(1, C * B * O)

        # Present the image as the LHS of the fused mix+resize matmul: (H, B*C*W), bf16.
        x1 = jnp.transpose(pred_rgb.astype(jnp.bfloat16), (2, 0, 1, 3)).reshape(H, B * C * W)

        grad_slab = _fused_sds_grad(sc, wn, bias, x1, r1bd, lh, nslab, B=B, C=C, O=O)
        # slab columns are (co, b, o2); cheap wrapper-side relayout to (B, C, 64, 64)
        grad = jnp.transpose(grad_slab.reshape(O, C, B, O), (2, 1, 0, 3))

        # SpecifyGradient.forward returns ones([1]); its custom backward has no
        # forward-pass equivalent.
        # TODO(synk): wire `grad` through jax.custom_vjp if autodiff through this
        #             loss is ever needed.
        loss = jnp.ones((1,), dtype=pred_rgb.dtype)
        return loss, grad

    def train_step(self, key, text_embeddings, pred_rgb,
                   guidance_scale=100.0, grad_scale=1.0):
        B, C, H, W = pred_rgb.shape
        r1bd, lh = self._consts(B, C, H, W)
        return self._train_step(key, text_embeddings, pred_rgb,
                                jnp.asarray(guidance_scale, jnp.float32),
                                jnp.asarray(grad_scale, jnp.float32),
                                r1bd, lh)


if __name__ == "__main__":
    key = jax.random.PRNGKey(0)
    kp, kd, ke, ks = jax.random.split(key, 4)

    B, C, H, W = 2, 3, 16, 16     # small RGB input (IF stage-I operates in pixel space)
    S, Hd = 8, 32                 # small stand-in for T5 (77, 4096)

    guidance = DeepFloydIFGuidance(kp, in_channels=C, text_hidden=Hd)
    pred_rgb = jax.random.uniform(kd, (B, C, H, W), jnp.float32)
    text_embeddings = jax.random.normal(ke, (2 * B, S, Hd), jnp.float32)

    loss, grad = guidance.train_step(ks, text_embeddings, pred_rgb,
                                     guidance_scale=100.0, grad_scale=1.0)
    jax.block_until_ready((loss, grad))

    assert loss.shape == (1,)
    assert grad.shape == (B, C, OUT_HW, OUT_HW)
    assert bool(jnp.all(jnp.isfinite(grad)))
    print("KERNEL_OK")
</pallas_src>

<mosaic_0001>
module attributes {stable_mosaic.version = 11 : i64} {
  func.func @kernel(%arg0: memref<4xf32, #tpu.memory_space<smem>>, %arg1: memref<3x3xf32, #tpu.memory_space<smem>>, %arg2: memref<1x384xf32, #tpu.memory_space<vmem>>, %arg3: memref<16x96xbf16, #tpu.memory_space<vmem>>, %arg4: memref<96x384xbf16, #tpu.memory_space<vmem>>, %arg5: memref<64x16xbf16, #tpu.memory_space<vmem>>, %arg6: memref<64x384xf32, #tpu.memory_space<vmem>>, %arg7: memref<64x384xf32, #tpu.memory_space<vmem>>) attributes {dimension_semantics = [], scalar_prefetch = 0 : i64, scratch_operands = 0 : i64, tpu.core_type = #tpu.core_type<tc>} {
    %c0 = arith.constant 0 : index
    %0 = memref.load %arg0[%c0] : memref<4xf32, #tpu.memory_space<smem>>
    %c1 = arith.constant 1 : index
    %1 = memref.load %arg0[%c1] : memref<4xf32, #tpu.memory_space<smem>>
    %c2 = arith.constant 2 : index
    %2 = memref.load %arg0[%c2] : memref<4xf32, #tpu.memory_space<smem>>
    %c0_0 = arith.constant 0 : index
    %c0_1 = arith.constant 0 : index
    %3 = vector.load %arg3[%c0_0, %c0_1] : memref<16x96xbf16, #tpu.memory_space<vmem>>, vector<16x96xbf16>
    %c0_2 = arith.constant 0 : index
    %c0_3 = arith.constant 0 : index
    %4 = vector.load %arg4[%c0_2, %c0_3] : memref<96x384xbf16, #tpu.memory_space<vmem>>, vector<96x384xbf16>
    %cst = arith.constant dense<0.000000e+00> : vector<16x384xf32>
    %5 = tpu.matmul %3, %4, %cst {dimension_numbers = #tpu.dot_dimension_numbers<[1], [0], [0], [1], [0, 0, 1, 1], [], []>} : vector<16x96xbf16>, vector<96x384xbf16>, vector<16x384xf32> -> vector<16x384xf32>
    %6 = vector.broadcast %0 : f32 to vector<16x384xf32>
    %7 = arith.mulf %6, %5 : vector<16x384xf32>
    %8 = arith.truncf %7 : vector<16x384xf32> to vector<16x384xbf16>
    %c0_4 = arith.constant 0 : index
    %c0_5 = arith.constant 0 : index
    %9 = vector.load %arg5[%c0_4, %c0_5] : memref<64x16xbf16, #tpu.memory_space<vmem>>, vector<64x16xbf16>
    %cst_6 = arith.constant dense<0.000000e+00> : vector<64x384xf32>
    %10 = tpu.matmul %9, %8, %cst_6 {dimension_numbers = #tpu.dot_dimension_numbers<[1], [0], [0], [1], [0, 0, 1, 1], [], []>} : vector<64x16xbf16>, vector<16x384xbf16>, vector<64x384xf32> -> vector<64x384xf32>
    %c0_7 = arith.constant 0 : index
    %c0_8 = arith.constant 0 : index
    %11 = memref.load %arg1[%c0_7, %c0_8] : memref<3x3xf32, #tpu.memory_space<smem>>
    %c0_9 = arith.constant 0 : index
    %c0_10 = arith.constant 0 : index
    %12 = vector.load %arg6[%c0_9, %c0_10] : memref<64x384xf32, #tpu.memory_space<vmem>>, vector<64x128xf32>
    %13 = vector.broadcast %11 : f32 to vector<64x128xf32>
    %14 = arith.mulf %13, %12 : vector<64x128xf32>
    %c0_11 = arith.constant 0 : index
    %c1_12 = arith.constant 1 : index
    %15 = memref.load %arg1[%c0_11, %c1_12] : memref<3x3xf32, #tpu.memory_space<smem>>
    %c0_13 = arith.constant 0 : index
    %c128 = arith.constant 128 : index
    %16 = vector.load %arg6[%c0_13, %c128] : memref<64x384xf32, #tpu.memory_space<vmem>>, vector<64x128xf32>
    %17 = vector.broadcast %15 : f32 to vector<64x128xf32>
    %18 = arith.mulf %17, %16 : vector<64x128xf32>
    %19 = arith.addf %14, %18 : vector<64x128xf32>
    %c0_14 = arith.constant 0 : index
    %c2_15 = arith.constant 2 : index
    %20 = memref.load %arg1[%c0_14, %c2_15] : memref<3x3xf32, #tpu.memory_space<smem>>
    %c0_16 = arith.constant 0 : index
    %c256 = arith.constant 256 : index
    %21 = vector.load %arg6[%c0_16, %c256] : memref<64x384xf32, #tpu.memory_space<vmem>>, vector<64x128xf32>
    %22 = vector.broadcast %20 : f32 to vector<64x128xf32>
    %23 = arith.mulf %22, %21 : vector<64x128xf32>
    %24 = arith.addf %19, %23 : vector<64x128xf32>
    %25 = vector.extract_strided_slice %10 {offsets = [0, 0], sizes = [64, 128], strides = [1, 1]} : vector<64x384xf32> to vector<64x128xf32>
    %26 = vector.broadcast %1 : f32 to vector<64x128xf32>
    %27 = arith.mulf %26, %24 : vector<64x128xf32>
    %28 = arith.addf %25, %27 : vector<64x128xf32>
    %c0_17 = arith.constant 0 : index
    %c0_18 = arith.constant 0 : index
    %29 = vector.load %arg6[%c0_17, %c0_18] : memref<64x384xf32, #tpu.memory_space<vmem>>, vector<64x128xf32>
    %30 = vector.broadcast %2 : f32 to vector<64x128xf32>
    %31 = arith.mulf %30, %29 : vector<64x128xf32>
    %32 = arith.subf %28, %31 : vector<64x128xf32>
    %c0_19 = arith.constant 0 : index
    %c0_20 = arith.constant 0 : index
    %33 = vector.load %arg2[%c0_19, %c0_20] : memref<1x384xf32, #tpu.memory_space<vmem>>, vector<1x128xf32>
    %34 = vector.broadcast %33 : vector<1x128xf32> to vector<64x128xf32>
    %35 = arith.addf %32, %34 : vector<64x128xf32>
    %36 = arith.cmpf one, %35, %35 : vector<64x128xf32>
    %cst_21 = arith.constant 0.000000e+00 : f32
    %37 = vector.broadcast %cst_21 : f32 to vector<64x128xf32>
    %38 = arith.select %36, %37, %35 : vector<64x128xi1>, vector<64x128xf32>
    %cst_22 = arith.constant -3.40282347E+38 : f32
    %cst_23 = arith.constant 3.40282347E+38 : f32
    %39 = vector.broadcast %cst_22 : f32 to vector<64x128xf32>
    %40 = arith.maximumf %39, %38 : vector<64x128xf32>
    %41 = vector.broadcast %cst_23 : f32 to vector<64x128xf32>
    %42 = arith.minimumf %41, %40 : vector<64x128xf32>
    %c0_24 = arith.constant 0 : index
    %c0_25 = arith.constant 0 : index
    %43 = vector.load %arg7[%c0_24, %c0_25] : memref<64x384xf32, #tpu.memory_space<vmem>>, vector<64x128xf32>
    tpu.vector_store %arg7[%c0_24, %c0_25], %42 {strides = array<i32>} : memref<64x384xf32, #tpu.memory_space<vmem>>, vector<64x128xf32>,
    %c1_26 = arith.constant 1 : index
    %c0_27 = arith.constant 0 : index
    %44 = memref.load %arg1[%c1_26, %c0_27] : memref<3x3xf32, #tpu.memory_space<smem>>
    %c0_28 = arith.constant 0 : index
    %c0_29 = arith.constant 0 : index
    %45 = vector.load %arg6[%c0_28, %c0_29] : memref<64x384xf32, #tpu.memory_space<vmem>>, vector<64x128xf32>
    %46 = vector.broadcast %44 : f32 to vector<64x128xf32>
    %47 = arith.mulf %46, %45 : vector<64x128xf32>
    %c1_30 = arith.constant 1 : index
    %c1_31 = arith.constant 1 : index
    %48 = memref.load %arg1[%c1_30, %c1_31] : memref<3x3xf32, #tpu.memory_space<smem>>
    %c0_32 = arith.constant 0 : index
    %c128_33 = arith.constant 128 : index
    %49 = vector.load %arg6[%c0_32, %c128_33] : memref<64x384xf32, #tpu.memory_space<vmem>>, vector<64x128xf32>
    %50 = vector.broadcast %48 : f32 to vector<64x128xf32>
    %51 = arith.mulf %50, %49 : vector<64x128xf32>
    %52 = arith.addf %47, %51 : vector<64x128xf32>
    %c1_34 = arith.constant 1 : index
    %c2_35 = arith.constant 2 : index
    %53 = memref.load %arg1[%c1_34, %c2_35] : memref<3x3xf32, #tpu.memory_space<smem>>
    %c0_36 = arith.constant 0 : index
    %c256_37 = arith.constant 256 : index
    %54 = vector.load %arg6[%c0_36, %c256_37] : memref<64x384xf32, #tpu.memory_space<vmem>>, vector<64x128xf32>
    %55 = vector.broadcast %53 : f32 to vector<64x128xf32>
    %56 = arith.mulf %55, %54 : vector<64x128xf32>
    %57 = arith.addf %52, %56 : vector<64x128xf32>
    %58 = vector.extract_strided_slice %10 {offsets = [0, 128], sizes = [64, 128], strides = [1, 1]} : vector<64x384xf32> to vector<64x128xf32>
    %59 = vector.broadcast %1 : f32 to vector<64x128xf32>
    %60 = arith.mulf %59, %57 : vector<64x128xf32>
    %61 = arith.addf %58, %60 : vector<64x128xf32>
    %c0_38 = arith.constant 0 : index
    %c128_39 = arith.constant 128 : index
    %62 = vector.load %arg6[%c0_38, %c128_39] : memref<64x384xf32, #tpu.memory_space<vmem>>, vector<64x128xf32>
    %63 = vector.broadcast %2 : f32 to vector<64x128xf32>
    %64 = arith.mulf %63, %62 : vector<64x128xf32>
    %65 = arith.subf %61, %64 : vector<64x128xf32>
    %c0_40 = arith.constant 0 : index
    %c128_41 = arith.constant 128 : index
    %66 = vector.load %arg2[%c0_40, %c128_41] : memref<1x384xf32, #tpu.memory_space<vmem>>, vector<1x128xf32>
    %67 = vector.broadcast %66 : vector<1x128xf32> to vector<64x128xf32>
    %68 = arith.addf %65, %67 : vector<64x128xf32>
    %69 = arith.cmpf one, %68, %68 : vector<64x128xf32>
    %cst_42 = arith.constant 0.000000e+00 : f32
    %70 = vector.broadcast %cst_42 : f32 to vector<64x128xf32>
    %71 = arith.select %69, %70, %68 : vector<64x128xi1>, vector<64x128xf32>
    %cst_43 = arith.constant -3.40282347E+38 : f32
    %cst_44 = arith.constant 3.40282347E+38 : f32
    %72 = vector.broadcast %cst_43 : f32 to vector<64x128xf32>
    %73 = arith.maximumf %72, %71 : vector<64x128xf32>
    %74 = vector.broadcast %cst_44 : f32 to vector<64x128xf32>
    %75 = arith.minimumf %74, %73 : vector<64x128xf32>
    %c0_45 = arith.constant 0 : index
    %c128_46 = arith.constant 128 : index
    %76 = vector.load %arg7[%c0_45, %c128_46] : memref<64x384xf32, #tpu.memory_space<vmem>>, vector<64x128xf32>
    tpu.vector_store %arg7[%c0_45, %c128_46], %75 {strides = array<i32>} : memref<64x384xf32, #tpu.memory_space<vmem>>, vector<64x128xf32>,
    %c2_47 = arith.constant 2 : index
    %c0_48 = arith.constant 0 : index
    %77 = memref.load %arg1[%c2_47, %c0_48] : memref<3x3xf32, #tpu.memory_space<smem>>
    %c0_49 = arith.constant 0 : index
    %c0_50 = arith.constant 0 : index
    %78 = vector.load %arg6[%c0_49, %c0_50] : memref<64x384xf32, #tpu.memory_space<vmem>>, vector<64x128xf32>
    %79 = vector.broadcast %77 : f32 to vector<64x128xf32>
    %80 = arith.mulf %79, %78 : vector<64x128xf32>
    %c2_51 = arith.constant 2 : index
    %c1_52 = arith.constant 1 : index
    %81 = memref.load %arg1[%c2_51, %c1_52] : memref<3x3xf32, #tpu.memory_space<smem>>
    %c0_53 = arith.constant 0 : index
    %c128_54 = arith.constant 128 : index
    %82 = vector.load %arg6[%c0_53, %c128_54] : memref<64x384xf32, #tpu.memory_space<vmem>>, vector<64x128xf32>
    %83 = vector.broadcast %81 : f32 to vector<64x128xf32>
    %84 = arith.mulf %83, %82 : vector<64x128xf32>
    %85 = arith.addf %80, %84 : vector<64x128xf32>
    %c2_55 = arith.constant 2 : index
    %c2_56 = arith.constant 2 : index
    %86 = memref.load %arg1[%c2_55, %c2_56] : memref<3x3xf32, #tpu.memory_space<smem>>
    %c0_57 = arith.constant 0 : index
    %c256_58 = arith.constant 256 : index
    %87 = vector.load %arg6[%c0_57, %c256_58] : memref<64x384xf32, #tpu.memory_space<vmem>>, vector<64x128xf32>
    %88 = vector.broadcast %86 : f32 to vector<64x128xf32>
    %89 = arith.mulf %88, %87 : vector<64x128xf32>
    %90 = arith.addf %85, %89 : vector<64x128xf32>
    %91 = vector.extract_strided_slice %10 {offsets = [0, 256], sizes = [64, 128], strides = [1, 1]} : vector<64x384xf32> to vector<64x128xf32>
    %92 = vector.broadcast %1 : f32 to vector<64x128xf32>
    %93 = arith.mulf %92, %90 : vector<64x128xf32>
    %94 = arith.addf %91, %93 : vector<64x128xf32>
    %c0_59 = arith.constant 0 : index
    %c256_60 = arith.constant 256 : index
    %95 = vector.load %arg6[%c0_59, %c256_60] : memref<64x384xf32, #tpu.memory_space<vmem>>, vector<64x128xf32>
    %96 = vector.broadcast %2 : f32 to vector<64x128xf32>
    %97 = arith.mulf %96, %95 : vector<64x128xf32>
    %98 = arith.subf %94, %97 : vector<64x128xf32>
    %c0_61 = arith.constant 0 : index
    %c256_62 = arith.constant 256 : index
    %99 = vector.load %arg2[%c0_61, %c256_62] : memref<1x384xf32, #tpu.memory_space<vmem>>, vector<1x128xf32>
    %100 = vector.broadcast %99 : vector<1x128xf32> to vector<64x128xf32>
    %101 = arith.addf %98, %100 : vector<64x128xf32>
    %102 = arith.cmpf one, %101, %101 : vector<64x128xf32>
    %cst_63 = arith.constant 0.000000e+00 : f32
    %103 = vector.broadcast %cst_63 : f32 to vector<64x128xf32>
    %104 = arith.select %102, %103, %101 : vector<64x128xi1>, vector<64x128xf32>
    %cst_64 = arith.constant -3.40282347E+38 : f32
    %cst_65 = arith.constant 3.40282347E+38 : f32
    %105 = vector.broadcast %cst_64 : f32 to vector<64x128xf32>
    %106 = arith.maximumf %105, %104 : vector<64x128xf32>
    %107 = vector.broadcast %cst_65 : f32 to vector<64x128xf32>
    %108 = arith.minimumf %107, %106 : vector<64x128xf32>
    %c0_66 = arith.constant 0 : index
    %c256_67 = arith.constant 256 : index
    %109 = vector.load %arg7[%c0_66, %c256_67] : memref<64x384xf32, #tpu.memory_space<vmem>>, vector<64x128xf32>
    tpu.vector_store %arg7[%c0_66, %c256_67], %108 {strides = array<i32>} : memref<64x384xf32, #tpu.memory_space<vmem>>, vector<64x128xf32>,
    return
  }
}

</mosaic_0001>

<llo_original>
// kernel: _train_step_impl.1
$region0: #{_train_step_impl.1}
  #allocation0 [shape = 'u32[]', space=smem, size = 0x4, offset = 0x4, fixed_abs, tag = 'smem constant byte address 0x4 - core index']
  #allocation1 [shape = 'u32[144,128]{1,0:T(1,128)}', space=vmem, size = 0x12000, scoped, tag = 'internal scratch']
  %s0 = inlined_call_operand.vmem [shape: f32[4], index: 0, kind: input, shape index: {}]
  %s1 = inlined_call_operand.vmem [shape: f32[3,3], index: 1, kind: input, shape index: {}]
  %s2 = inlined_call_operand.vmem [shape: f32[1,384], index: 2, kind: input, shape index: {}]
  %s3 = inlined_call_operand.vmem [shape: bf16[16,96], index: 3, kind: input, shape index: {}]
  %s4 = inlined_call_operand.vmem [shape: bf16[96,384], index: 4, kind: input, shape index: {}]
  %s5 = inlined_call_operand.vmem [shape: bf16[64,16], index: 5, kind: input, shape index: {}]
  %s6 = inlined_call_operand.vmem [shape: f32[64,384], index: 6, kind: input, shape index: {}]
  %s7 = inlined_call_operand.vmem [shape: f32[64,384], index: 7, kind: output, shape index: {}]
  %s8 = sld [smem:[#allocation0]]
  $region46: #{_train_step_impl.1} parent=0
    _
  %s10 = ssub.s32 1, %s8
  %s11 = scalar_select 0, %s10, %s8
  $region1: #{_train_step_impl.1} parent=0
    #allocation2 [shape = 'u8[512]{0}', space=smem, size = 0x200, scoped, tag = 'input window, operand 0, single buffered']
    #allocation3 [shape = 's32[1]{0}', space=sflag, size = 0x4, scoped, tag = 'scoped memory for _train_step_impl.1']
    #allocation4 [shape = 'u8[2048]{0}', space=smem, size = 0x800, scoped, tag = 'input window, operand 1, single buffered']
    #allocation5 [shape = 's32[1]{0}', space=sflag, size = 0x4, scoped, tag = 'scoped memory for _train_step_impl.1']
    %12 = vsyncpa [#allocation3], 0
    %13 = vsyncpa [#allocation5], 0
    // Predicated region
    $region2: #{_train_step_impl.1} parent=1 // pred_check
      _
    $region3: #{_train_step_impl.1} parent=1 // pred_check_branch
      %15 = sbr.rel (0) target = $region5
    $region4: #{_train_step_impl.1} parent=1 // pred_region
      %s17 = ssub.s32 16, 16
      %18 = vsyncadd [#allocation3], %s17
      %s20 = sshll.u32 %s0, 4
      %s21 = int_to_ptr.vmem [resolvable:$true] %s20
      %23 = dma.vmem_to_smem %s21, 16, [#allocation2], [#allocation3]
    $region5: #{_train_step_impl.1} parent=1 // pred_fallthru
      _
    // Predicated region
    $region6: #{_train_step_impl.1} parent=1 // pred_check
      _
    $region7: #{_train_step_impl.1} parent=1 // pred_check_branch
      %25 = sbr.rel (0) target = $region9
    $region8: #{_train_step_impl.1} parent=1 // pred_region
      %s27 = ssub.s32 64, 64
      %28 = vsyncadd [#allocation5], %s27
      %s30 = sshll.u32 %s1, 4
      %s31 = int_to_ptr.vmem [resolvable:$true] %s30
      %33 = dma.vmem_to_smem %s31, 64, [#allocation4], [#allocation5]
    $region9: #{_train_step_impl.1} parent=1 // pred_fallthru
      _
    // Predicated region
    $region10: #{_train_step_impl.1} parent=1 // pred_check
      _
    $region11: #{_train_step_impl.1} parent=1 // pred_check_branch
      %35 = sbr.rel (0) target = $region13
    $region12: #{_train_step_impl.1} parent=1 // pred_region
      _
    $region13: #{_train_step_impl.1} parent=1 // pred_fallthru
      _
    // Predicated region
    $region14: #{_train_step_impl.1} parent=1 // pred_check
      _
    $region15: #{_train_step_impl.1} parent=1 // pred_check_branch
      %37 = sbr.rel (0) target = $region17
    $region16: #{_train_step_impl.1} parent=1 // pred_region
      _
    $region17: #{_train_step_impl.1} parent=1 // pred_fallthru
      _
    // Predicated region
    $region18: #{_train_step_impl.1} parent=1 // pred_check
      _
    $region19: #{_train_step_impl.1} parent=1 // pred_check_branch
      %39 = sbr.rel (0) target = $region21
    $region20: #{_train_step_impl.1} parent=1 // pred_region
      _
    $region21: #{_train_step_impl.1} parent=1 // pred_fallthru
      _
    // Predicated region
    $region22: #{_train_step_impl.1} parent=1 // pred_check
      _
    $region23: #{_train_step_impl.1} parent=1 // pred_check_branch
      %41 = sbr.rel (0) target = $region25
    $region24: #{_train_step_impl.1} parent=1 // pred_region
      _
    $region25: #{_train_step_impl.1} parent=1 // pred_fallthru
      _
    // Predicated region
    $region26: #{_train_step_impl.1} parent=1 // pred_check
      _
    $region27: #{_train_step_impl.1} parent=1 // pred_check_branch
      %43 = sbr.rel (0) target = $region29
    $region28: #{_train_step_impl.1} parent=1 // pred_region
      _
    $region29: #{_train_step_impl.1} parent=1 // pred_fallthru
      _
    // Predicated region
    $region30: #{_train_step_impl.1} parent=1 // pred_check
      _
    $region31: #{_train_step_impl.1} parent=1 // pred_check_branch
      %45 = sbr.rel (0) target = $region33
    $region32: #{_train_step_impl.1} parent=1 // pred_region
      %46 = dma.done [#allocation3], 16
    $region33: #{_train_step_impl.1} parent=1 // pred_fallthru
      _
    // Predicated region
    $region34: #{_train_step_impl.1} parent=1 // pred_check
      _
    $region35: #{_train_step_impl.1} parent=1 // pred_check_branch
      %48 = sbr.rel (0) target = $region37
    $region36: #{_train_step_impl.1} parent=1 // pred_region
      %49 = dma.done [#allocation5], 64
    $region37: #{_train_step_impl.1} parent=1 // pred_fallthru
      _
    %50 = sfence
    %s52 = sld [smem:[#allocation2]]
    %s53 = sld [smem:[#allocation2 + $0x1]]
    %s54 = sld [smem:[#allocation2 + $0x2]]
    %v55 = vld [vmem:[%s3] sm:$0xf]
    %v56 = vld [vmem:[%s3 + $0x4] sm:$0xf]
    %v57 = vld [vmem:[%s4] sm:$0xff]
    %v58 = vld [vmem:[%s4 + $0x8] sm:$0xf]
    %v59 = vld [vmem:[%s4 + $0xc] sm:$0xff]
    %v60 = vld [vmem:[%s4 + $0x14] sm:$0xf]
    %v61 = vld [vmem:[%s4 + $0x18] sm:$0xff]
    %v62 = vld [vmem:[%s4 + $0x20] sm:$0xf]
    %v63 = vld [vmem:[%s4 + $0x24] sm:$0xff]
    %v64 = vld [vmem:[%s4 + $0x2c] sm:$0xf]
    %v65 = vld [vmem:[%s4 + $0x30] sm:$0xff]
    %v66 = vld [vmem:[%s4 + $0x38] sm:$0xf]
    %v67 = vld [vmem:[%s4 + $0x3c] sm:$0xff]
    %v68 = vld [vmem:[%s4 + $0x44] sm:$0xf]
    %v69 = vld [vmem:[%s4 + $0x48] sm:$0xff]
    %v70 = vld [vmem:[%s4 + $0x50] sm:$0xf]
    %v71 = vld [vmem:[%s4 + $0x54] sm:$0xff]
    %v72 = vld [vmem:[%s4 + $0x5c] sm:$0xf]
    %v73 = vld [vmem:[%s4 + $0x60] sm:$0xff]
    %v74 = vld [vmem:[%s4 + $0x68] sm:$0xf]
    %v75 = vld [vmem:[%s4 + $0x6c] sm:$0xff]
    %v76 = vld [vmem:[%s4 + $0x74] sm:$0xf]
    %v77 = vld [vmem:[%s4 + $0x78] sm:$0xff]
    %v78 = vld [vmem:[%s4 + $0x80] sm:$0xf]
    %v79 = vld [vmem:[%s4 + $0x84] sm:$0xff]
    %v80 = vld [vmem:[%s4 + $0x8c] sm:$0xf]
    %v83 = vunpack.c.l.b16 %v55
    %v84 = vunpack.c.l.b16 %v56
    %v85 = vpack.c.b16 %v84, %v83
    %v110 = vunpack.c.l.b16 %v57
    %v111 = vunpack.c.h.b16 %v57
    %v112 = vunpack.c.l.b16 %v58
    %v113 = vunpack.c.l.b16 %v59
    %v114 = vunpack.c.h.b16 %v59
    %v115 = vunpack.c.l.b16 %v60
    %v116 = vunpack.c.l.b16 %v61
    %v117 = vunpack.c.h.b16 %v61
    %v118 = vunpack.c.l.b16 %v62
    %v119 = vunpack.c.l.b16 %v63
    %v120 = vunpack.c.h.b16 %v63
    %v121 = vunpack.c.l.b16 %v64
    %v122 = vunpack.c.l.b16 %v65
    %v123 = vunpack.c.h.b16 %v65
    %v124 = vunpack.c.l.b16 %v66
    %v125 = vunpack.c.l.b16 %v67
    %v126 = vunpack.c.h.b16 %v67
    %v127 = vunpack.c.l.b16 %v68
    %v128 = vunpack.c.l.b16 %v69
    %v129 = vunpack.c.h.b16 %v69
    %v130 = vunpack.c.l.b16 %v70
    %v131 = vunpack.c.l.b16 %v71
    %v132 = vunpack.c.h.b16 %v71
    %v133 = vunpack.c.l.b16 %v72
    %v134 = vunpack.c.l.b16 %v73
    %v135 = vunpack.c.h.b16 %v73
    %v136 = vunpack.c.l.b16 %v74
    %v137 = vunpack.c.l.b16 %v75
    %v138 = vunpack.c.h.b16 %v75
    %v139 = vunpack.c.l.b16 %v76
    %v140 = vunpack.c.l.b16 %v77
    %v141 = vunpack.c.h.b16 %v77
    %v142 = vunpack.c.l.b16 %v78
    %v143 = vunpack.c.l.b16 %v79
    %v144 = vunpack.c.h.b16 %v79
    %v145 = vunpack.c.l.b16 %v80
    %v146 = vpack.c.b16 %v113, %v110
    %v147 = vpack.c.b16 %v114, %v111
    %v148 = vpack.c.b16 %v115, %v112
    %v149 = vpack.c.b16 %v119, %v116
    %v150 = vpack.c.b16 %v120, %v117
    %v151 = vpack.c.b16 %v121, %v118
    %v152 = vpack.c.b16 %v125, %v122
    %v153 = vpack.c.b16 %v126, %v123
    %v154 = vpack.c.b16 %v127, %v124
    %v155 = vpack.c.b16 %v131, %v128
    %v156 = vpack.c.b16 %v132, %v129
    %v157 = vpack.c.b16 %v133, %v130
    %v158 = vpack.c.b16 %v137, %v134
    %v159 = vpack.c.b16 %v138, %v135
    %v160 = vpack.c.b16 %v139, %v136
    %v161 = vpack.c.b16 %v143, %v140
    %v162 = vpack.c.b16 %v144, %v141
    %v163 = vpack.c.b16 %v145, %v142
    %vm182 = vcmask 785408
    %v184 = vsel %vm182, %v85, 0
    %186 = vmatprep.subr.bf16.mxu0 0
    %187 = vmatpush1.bf16.msra.mxu0 0
    %188 = vmatprep.subr.bf16.mxu0 0
    %189 = vmatpush1.bf16.msra.mxu0 0
    %190 = vmatprep.subr.bf16.mxu0 %v162
    %191 = vmatpush1.bf16.msra.mxu0 %v161
    %192 = vmatprep.subr.bf16.mxu0 %v159
    %193 = vmatpush1.bf16.msra.mxu0 %v158
    %194 = vmatprep.subr.bf16.mxu0 %v156
    %195 = vmatpush1.bf16.msra.mxu0 %v155
    %196 = vmatprep.subr.bf16.mxu0 %v153
    %197 = vmatpush1.bf16.msra.mxu0 %v152
    %198 = vmatprep.subr.bf16.mxu0 %v150
    %199 = vmatpush1.bf16.msra.mxu0 %v149
    %200 = vmatprep.subr.bf16.mxu0 %v147
    %201 = vmatpush1.bf16.msra.mxu0 %v146
    %202 = vmatprep.subr.bf16.mxu0 0
    %203 = vmatpush2.bf16.msra.mxu0 0
    %204 = vmatprep.subr.bf16.mxu0 0
    %205 = vmatpush2.bf16.msra.mxu0 0
    %206 = vmatprep.subr.bf16.mxu0 0
    %207 = vmatpush2.bf16.msra.mxu0 0
    %208 = vmatprep.subr.bf16.mxu0 0
    %209 = vmatpush2.bf16.msra.mxu0 0
    %210 = vmatprep.subr.bf16.mxu0 0
    %211 = vmatpush2.bf16.msra.mxu0 0
    %212 = vmatprep.subr.bf16.mxu0 0
    %213 = vmatpush2.bf16.msra.mxu0 0
    %214 = vmatprep.subr.bf16.mxu0 0
    %215 = vmatpush2.bf16.msra.mxu0 0
    %216 = vmatprep.subr.bf16.mxu0 0
    %217 = vmatpush2.bf16.msra.mxu0 0
    %218 = vmatprep.mubr.bf16.mxu0 0
    %219 = vmatmul.mubr.bf16.gmra.mxu0 %v184
    %v220 = vpop.f32.mrf.mxu0
    %v221 = vadd.f32 0.0, %v220
    %v222 = vpop.f32.mrf.mxu0
    %v223 = vadd.f32 0.0, %v222
    %v224 = vpop.f32.mrf.mxu0
    %v225 = vadd.f32 0.0, %v224
    %v226 = vpop.f32.mrf.mxu0
    %v227 = vadd.f32 0.0, %v226
    %228 = vdwg.mxu0
    %229 = vmatprep.subr.bf16.mxu0 0
    %230 = vmatpush1.bf16.msra.mxu0 0
    %231 = vmatprep.subr.bf16.mxu0 0
    %232 = vmatpush1.bf16.msra.mxu0 0
    %233 = vmatprep.subr.bf16.mxu0 0
    %234 = vmatpush1.bf16.msra.mxu0 %v163
    %235 = vmatprep.subr.bf16.mxu0 0
    %236 = vmatpush1.bf16.msra.mxu0 %v160
    %237 = vmatprep.subr.bf16.mxu0 0
    %238 = vmatpush1.bf16.msra.mxu0 %v157
    %239 = vmatprep.subr.bf16.mxu0 0
    %240 = vmatpush1.bf16.msra.mxu0 %v154
    %241 = vmatprep.subr.bf16.mxu0 0
    %242 = vmatpush1.bf16.msra.mxu0 %v151
    %243 = vmatprep.subr.bf16.mxu0 0
    %244 = vmatpush1.bf16.msra.mxu0 %v148
    %245 = vmatprep.subr.bf16.mxu0 0
    %246 = vmatpush2.bf16.msra.mxu0 0
    %247 = vmatprep.subr.bf16.mxu0 0
    %248 = vmatpush2.bf16.msra.mxu0 0
    %249 = vmatprep.subr.bf16.mxu0 0
    %250 = vmatpush2.bf16.msra.mxu0 0
    %251 = vmatprep.subr.bf16.mxu0 0
    %252 = vmatpush2.bf16.msra.mxu0 0
    %253 = vmatprep.subr.bf16.mxu0 0
    %254 = vmatpush2.bf16.msra.mxu0 0
    %255 = vmatprep.subr.bf16.mxu0 0
    %256 = vmatpush2.bf16.msra.mxu0 0
    %257 = vmatprep.subr.bf16.mxu0 0
    %258 = vmatpush2.bf16.msra.mxu0 0
    %259 = vmatprep.subr.bf16.mxu0 0
    %260 = vmatpush2.bf16.msra.mxu0 0
    %261 = vmatprep.mubr.bf16.mxu0 0
    %262 = vmatmul.mubr.bf16.gmra.mxu0 %v184
    %v263 = vpop.f32.mrf.mxu0
    %v264 = vadd.f32 0.0, %v263
    %v265 = vpop.f32.mrf.mxu0
    %v266 = vpop.f32.mrf.mxu0
    %v267 = vadd.f32 0.0, %v266
    %v268 = vpop.f32.mrf.mxu0
    %269 = vdwg.mxu0
    %v270 = vstv %s52
    %v271 = vmul.f32 %v270, %v221
    %v272 = vmul.f32 %v270, %v223
    %v273 = vmul.f32 %v270, %v264
    %v274 = vmul.f32 %v270, %v225
    %v275 = vmul.f32 %v270, %v227
    %v276 = vmul.f32 %v270, %v267
    %v277 = vpack.c.bf16 %v274, %v271
    %v278 = vpack.c.bf16 %v275, %v272
    %v279 = vpack.c.bf16 %v276, %v273
    %v280 = vld [vmem:[%s5] sm:$0xf]
    %v281 = vld [vmem:[%s5 + $0x4] sm:$0xf]
    %v282 = vld [vmem:[%s5 + $0x8] sm:$0xf]
    %v283 = vld [vmem:[%s5 + $0xc] sm:$0xf]
    %v284 = vld [vmem:[%s5 + $0x10] sm:$0xf]
    %v285 = vld [vmem:[%s5 + $0x14] sm:$0xf]
    %v286 = vld [vmem:[%s5 + $0x18] sm:$0xf]
    %v287 = vld [vmem:[%s5 + $0x1c] sm:$0xf]
    %v296 = vunpack.c.l.b16 %v280
    %v297 = vunpack.c.l.b16 %v281
    %v298 = vunpack.c.l.b16 %v282
    %v299 = vunpack.c.l.b16 %v283
    %v300 = vunpack.c.l.b16 %v284
    %v301 = vunpack.c.l.b16 %v285
    %v302 = vunpack.c.l.b16 %v286
    %v303 = vunpack.c.l.b16 %v287
    %v304 = vpack.c.b16 %v297, %v296
    %v305 = vpack.c.b16 %v299, %v298
    %v306 = vpack.c.b16 %v301, %v300
    %v307 = vpack.c.b16 %v303, %v302
    %vm308 = vcmask 130048
    %v310 = vsel %vm308, %v304, 0
    %v313 = vsel %vm308, %v305, 0
    %v316 = vsel %vm308, %v306, 0
    %v319 = vsel %vm308, %v307, 0
    %321 = vmatprep.subr.bf16.mxu0 0
    %322 = vmatpush1.bf16.msra.mxu0 0
    %323 = vmatprep.subr.bf16.mxu0 0
    %324 = vmatpush1.bf16.msra.mxu0 0
    %325 = vmatprep.subr.bf16.mxu0 0
    %326 = vmatpush1.bf16.msra.mxu0 0
    %327 = vmatprep.subr.bf16.mxu0 0
    %328 = vmatpush1.bf16.msra.mxu0 0
    %329 = vmatprep.subr.bf16.mxu0 0
    %330 = vmatpush1.bf16.msra.mxu0 0
    %331 = vmatprep.subr.bf16.mxu0 0
    %332 = vmatpush1.bf16.msra.mxu0 0
    %333 = vmatprep.subr.bf16.mxu0 0
    %334 = vmatpush1.bf16.msra.mxu0 0
    %335 = vmatprep.subr.bf16.mxu0 %v278
    %336 = vmatpush1.bf16.msra.mxu0 %v277
    %337 = vmatprep.subr.bf16.mxu0 0
    %338 = vmatpush2.bf16.msra.mxu0 0
    %339 = vmatprep.subr.bf16.mxu0 0
    %340 = vmatpush2.bf16.msra.mxu0 0
    %341 = vmatprep.subr.bf16.mxu0 0
    %342 = vmatpush2.bf16.msra.mxu0 0
    %343 = vmatprep.subr.bf16.mxu0 0
    %344 = vmatpush2.bf16.msra.mxu0 0
    %345 = vmatprep.subr.bf16.mxu0 0
    %346 = vmatpush2.bf16.msra.mxu0 0
    %347 = vmatprep.subr.bf16.mxu0 0
    %348 = vmatpush2.bf16.msra.mxu0 0
    %349 = vmatprep.subr.bf16.mxu0 0
    %350 = vmatpush2.bf16.msra.mxu0 0
    %351 = vmatprep.subr.bf16.mxu0 0
    %352 = vmatpush2.bf16.msra.mxu0 0
    %353 = vmatprep.mubr.bf16.mxu0 0
    %354 = vmatmul.mubr.bf16.gmra.mxu0 %v310
    %v355 = vpop.f32.mrf.mxu0
    %v356 = vadd.f32 0.0, %v355
    %v357 = vpop.f32.mrf.mxu0
    %v358 = vadd.f32 0.0, %v357
    %v359 = vpop.f32.mrf.mxu0
    %v360 = vadd.f32 0.0, %v359
    %v361 = vpop.f32.mrf.mxu0
    %v362 = vadd.f32 0.0, %v361
    %363 = vmatprep.mubr.bf16.mxu0 0
    %364 = vmatmul.mubr.bf16.gmra.mxu0 %v313
    %v365 = vpop.f32.mrf.mxu0
    %v366 = vadd.f32 0.0, %v365
    %v367 = vpop.f32.mrf.mxu0
    %v368 = vadd.f32 0.0, %v367
    %v369 = vpop.f32.mrf.mxu0
    %v370 = vadd.f32 0.0, %v369
    %v371 = vpop.f32.mrf.mxu0
    %v372 = vadd.f32 0.0, %v371
    %373 = vmatprep.mubr.bf16.mxu0 0
    %374 = vmatmul.mubr.bf16.gmra.mxu0 %v316
    %v375 = vpop.f32.mrf.mxu0
    %v376 = vadd.f32 0.0, %v375
    %v377 = vpop.f32.mrf.mxu0
    %v378 = vadd.f32 0.0, %v377
    %v379 = vpop.f32.mrf.mxu0
    %v380 = vadd.f32 0.0, %v379
    %v381 = vpop.f32.mrf.mxu0
    %v382 = vadd.f32 0.0, %v381
    %383 = vmatprep.mubr.bf16.mxu0 0
    %384 = vmatmul.mubr.bf16.gmra.mxu0 %v319
    %v385 = vpop.f32.mrf.mxu0
    %v386 = vadd.f32 0.0, %v385
    %v387 = vpop.f32.mrf.mxu0
    %v388 = vadd.f32 0.0, %v387
    %v389 = vpop.f32.mrf.mxu0
    %v390 = vadd.f32 0.0, %v389
    %v391 = vpop.f32.mrf.mxu0
    %v392 = vadd.f32 0.0, %v391
    %393 = vdwg.mxu0
    %394 = vmatprep.subr.bf16.mxu0 0
    %395 = vmatpush1.bf16.msra.mxu0 0
    %396 = vmatprep.subr.bf16.mxu0 0
    %397 = vmatpush1.bf16.msra.mxu0 0
    %398 = vmatprep.subr.bf16.mxu0 0
    %399 = vmatpush1.bf16.msra.mxu0 0
    %400 = vmatprep.subr.bf16.mxu0 0
    %401 = vmatpush1.bf16.msra.mxu0 0
    %402 = vmatprep.subr.bf16.mxu0 0
    %403 = vmatpush1.bf16.msra.mxu0 0
    %404 = vmatprep.subr.bf16.mxu0 0
    %405 = vmatpush1.bf16.msra.mxu0 0
    %406 = vmatprep.subr.bf16.mxu0 0
    %407 = vmatpush1.bf16.msra.mxu0 0
    %408 = vmatprep.subr.bf16.mxu0 0
    %409 = vmatpush1.bf16.msra.mxu0 %v279
    %410 = vmatprep.subr.bf16.mxu0 0
    %411 = vmatpush2.bf16.msra.mxu0 0
    %412 = vmatprep.subr.bf16.mxu0 0
    %413 = vmatpush2.bf16.msra.mxu0 0
    %414 = vmatprep.subr.bf16.mxu0 0
    %415 = vmatpush2.bf16.msra.mxu0 0
    %416 = vmatprep.subr.bf16.mxu0 0
    %417 = vmatpush2.bf16.msra.mxu0 0
    %418 = vmatprep.subr.bf16.mxu0 0
    %419 = vmatpush2.bf16.msra.mxu0 0
    %420 = vmatprep.subr.bf16.mxu0 0
    %421 = vmatpush2.bf16.msra.mxu0 0
    %422 = vmatprep.subr.bf16.mxu0 0
    %423 = vmatpush2.bf16.msra.mxu0 0
    %424 = vmatprep.subr.bf16.mxu0 0
    %425 = vmatpush2.bf16.msra.mxu0 0
    %426 = vmatprep.mubr.bf16.mxu0 0
    %427 = vmatmul.mubr.bf16.gmra.mxu0 %v310
    %v428 = vpop.f32.mrf.mxu0
    %v429 = vadd.f32 0.0, %v428
    %v430 = vpop.f32.mrf.mxu0
    %v431 = vpop.f32.mrf.mxu0
    %v432 = vadd.f32 0.0, %v431
    %v433 = vpop.f32.mrf.mxu0
    %434 = vmatprep.mubr.bf16.mxu0 0
    %435 = vmatmul.mubr.bf16.gmra.mxu0 %v313
    %v436 = vpop.f32.mrf.mxu0
    %v437 = vadd.f32 0.0, %v436
    %v438 = vpop.f32.mrf.mxu0
    %v439 = vpop.f32.mrf.mxu0
    %v440 = vadd.f32 0.0, %v439
    %v441 = vpop.f32.mrf.mxu0
    %442 = vmatprep.mubr.bf16.mxu0 0
    %443 = vmatmul.mubr.bf16.gmra.mxu0 %v316
    %v444 = vpop.f32.mrf.mxu0
    %v445 = vadd.f32 0.0, %v444
    %v446 = vpop.f32.mrf.mxu0
    %v447 = vpop.f32.mrf.mxu0
    %v448 = vadd.f32 0.0, %v447
    %v449 = vpop.f32.mrf.mxu0
    %450 = vmatprep.mubr.bf16.mxu0 0
    %451 = vmatmul.mubr.bf16.gmra.mxu0 %v319
    %v452 = vpop.f32.mrf.mxu0
    %v453 = vadd.f32 0.0, %v452
    %v454 = vpop.f32.mrf.mxu0
    %v455 = vpop.f32.mrf.mxu0
    %v456 = vadd.f32 0.0, %v455
    %v457 = vpop.f32.mrf.mxu0
    %458 = vdwg.mxu0
    %s459 = sld [smem:[#allocation4]]
    %v460 = vld [vmem:[%s6] sm:$0xff]
    %v461 = vld [vmem:[%s6 + $0x18] sm:$0xff]
    %v462 = vld [vmem:[%s6 + $0x30] sm:$0xff]
    %v463 = vld [vmem:[%s6 + $0x48] sm:$0xff]
    %v464 = vld [vmem:[%s6 + $0x60] sm:$0xff]
    %v465 = vld [vmem:[%s6 + $0x78] sm:$0xff]
    %v466 = vld [vmem:[%s6 + $0x90] sm:$0xff]
    %v467 = vld [vmem:[%s6 + $0xa8] sm:$0xff]
    %v468 = vstv %s459
    %v469 = vmul.f32 %v468, %v460
    %v470 = vmul.f32 %v468, %v461
    %v471 = vmul.f32 %v468, %v462
    %v472 = vmul.f32 %v468, %v463
    %v473 = vmul.f32 %v468, %v464
    %v474 = vmul.f32 %v468, %v465
    %v475 = vmul.f32 %v468, %v466
    %v476 = vmul.f32 %v468, %v467
    %s477 = sld [smem:[#allocation4 + $0x1]]
    %v478 = vld [vmem:[%s6 + $0x8] sm:$0xff]
    %v479 = vld [vmem:[%s6 + $0x20] sm:$0xff]
    %v480 = vld [vmem:[%s6 + $0x38] sm:$0xff]
    %v481 = vld [vmem:[%s6 + $0x50] sm:$0xff]
    %v482 = vld [vmem:[%s6 + $0x68] sm:$0xff]
    %v483 = vld [vmem:[%s6 + $0x80] sm:$0xff]
    %v484 = vld [vmem:[%s6 + $0x98] sm:$0xff]
    %v485 = vld [vmem:[%s6 + $0xb0] sm:$0xff]
    %v486 = vstv %s477
    %v487 = vmul.f32 %v486, %v478
    %v488 = vmul.f32 %v486, %v479
    %v489 = vmul.f32 %v486, %v480
    %v490 = vmul.f32 %v486, %v481
    %v491 = vmul.f32 %v486, %v482
    %v492 = vmul.f32 %v486, %v483
    %v493 = vmul.f32 %v486, %v484
    %v494 = vmul.f32 %v486, %v485
    %v495 = vadd.f32 %v469, %v487
    %v496 = vadd.f32 %v470, %v488
    %v497 = vadd.f32 %v471, %v489
    %v498 = vadd.f32 %v472, %v490
    %v499 = vadd.f32 %v473, %v491
    %v500 = vadd.f32 %v474, %v492
    %v501 = vadd.f32 %v475, %v493
    %v502 = vadd.f32 %v476, %v494
    %s503 = sld [smem:[#allocation4 + $0x2]]
    %v504 = vld [vmem:[%s6 + $0x10] sm:$0xff]
    %v505 = vld [vmem:[%s6 + $0x28] sm:$0xff]
    %v506 = vld [vmem:[%s6 + $0x40] sm:$0xff]
    %v507 = vld [vmem:[%s6 + $0x58] sm:$0xff]
    %v508 = vld [vmem:[%s6 + $0x70] sm:$0xff]
    %v509 = vld [vmem:[%s6 + $0x88] sm:$0xff]
    %v510 = vld [vmem:[%s6 + $0xa0] sm:$0xff]
    %v511 = vld [vmem:[%s6 + $0xb8] sm:$0xff]
    %v512 = vstv %s503
    %v513 = vmul.f32 %v512, %v504
    %v514 = vmul.f32 %v512, %v505
    %v515 = vmul.f32 %v512, %v506
    %v516 = vmul.f32 %v512, %v507
    %v517 = vmul.f32 %v512, %v508
    %v518 = vmul.f32 %v512, %v509
    %v519 = vmul.f32 %v512, %v510
    %v520 = vmul.f32 %v512, %v511
    %v521 = vadd.f32 %v495, %v513
    %v522 = vadd.f32 %v496, %v514
    %v523 = vadd.f32 %v497, %v515
    %v524 = vadd.f32 %v498, %v516
    %v525 = vadd.f32 %v499, %v517
    %v526 = vadd.f32 %v500, %v518
    %v527 = vadd.f32 %v501, %v519
    %v528 = vadd.f32 %v502, %v520
    %v529 = vstv %s53
    %v530 = vmul.f32 %v529, %v521
    %v531 = vmul.f32 %v529, %v522
    %v532 = vmul.f32 %v529, %v523
    %v533 = vmul.f32 %v529, %v524
    %v534 = vmul.f32 %v529, %v525
    %v535 = vmul.f32 %v529, %v526
    %v536 = vmul.f32 %v529, %v527
    %v537 = vmul.f32 %v529, %v528
    %v538 = vadd.f32 %v356, %v530
    %v539 = vadd.f32 %v360, %v531
    %v540 = vadd.f32 %v366, %v532
    %v541 = vadd.f32 %v370, %v533
    %v542 = vadd.f32 %v376, %v534
    %v543 = vadd.f32 %v380, %v535
    %v544 = vadd.f32 %v386, %v536
    %v545 = vadd.f32 %v390, %v537
    %v546 = vstv %s54
    %v547 = vmul.f32 %v546, %v460
    %v548 = vmul.f32 %v546, %v461
    %v549 = vmul.f32 %v546, %v462
    %v550 = vmul.f32 %v546, %v463
    %v551 = vmul.f32 %v546, %v464
    %v552 = vmul.f32 %v546, %v465
    %v553 = vmul.f32 %v546, %v466
    %v554 = vmul.f32 %v546, %v467
    %v555 = vsub.f32 %v538, %v547
    %v556 = vsub.f32 %v539, %v548
    %v557 = vsub.f32 %v540, %v549
    %v558 = vsub.f32 %v541, %v550
    %v559 = vsub.f32 %v542, %v551
    %v560 = vsub.f32 %v543, %v552
    %v561 = vsub.f32 %v544, %v553
    %v562 = vsub.f32 %v545, %v554
    %v563 = vld [vmem:[%s2] sm:$0x1]
    %v565 = vlaneseq
    %v566 = vshrl.u32 %v565, 7
    %v567 = vsub.s32 0, %v566
    %v568 = vrot.slane %v563, %v567
    %v570 = vadd.f32 %v555, %v568
    %v571 = vadd.f32 %v556, %v568
    %v572 = vadd.f32 %v557, %v568
    %v573 = vadd.f32 %v558, %v568
    %v574 = vadd.f32 %v559, %v568
    %v575 = vadd.f32 %v560, %v568
    %v576 = vadd.f32 %v561, %v568
    %v577 = vadd.f32 %v562, %v568
    %vm578 = vcmp.ne.f32.partialorder %v570, %v570
    %vm579 = vcmp.ne.f32.partialorder %v571, %v571
    %vm580 = vcmp.ne.f32.partialorder %v572, %v572
    %vm581 = vcmp.ne.f32.partialorder %v573, %v573
    %vm582 = vcmp.ne.f32.partialorder %v574, %v574
    %vm583 = vcmp.ne.f32.partialorder %v575, %v575
    %vm584 = vcmp.ne.f32.partialorder %v576, %v576
    %vm585 = vcmp.ne.f32.partialorder %v577, %v577
    %v586 = vsel %vm578, 0.0, %v570
    %v587 = vsel %vm579, 0.0, %v571
    %v588 = vsel %vm580, 0.0, %v572
    %v589 = vsel %vm581, 0.0, %v573
    %v590 = vsel %vm582, 0.0, %v574
    %v591 = vsel %vm583, 0.0, %v575
    %v592 = vsel %vm584, 0.0, %v576
    %v593 = vsel %vm585, 0.0, %v577
    %v594 = vmax.f32 %v586, -3.4028235e+38
    %v595 = vmax.f32 %v587, -3.4028235e+38
    %v596 = vmax.f32 %v588, -3.4028235e+38
    %v597 = vmax.f32 %v589, -3.4028235e+38
    %v598 = vmax.f32 %v590, -3.4028235e+38
    %v599 = vmax.f32 %v591, -3.4028235e+38
    %v600 = vmax.f32 %v592, -3.4028235e+38
    %v601 = vmax.f32 %v593, -3.4028235e+38
    %v602 = vmin.f32 %v594, 3.4028235e+38
    %v603 = vmin.f32 %v595, 3.4028235e+38
    %v604 = vmin.f32 %v596, 3.4028235e+38
    %v605 = vmin.f32 %v597, 3.4028235e+38
    %v606 = vmin.f32 %v598, 3.4028235e+38
    %v607 = vmin.f32 %v599, 3.4028235e+38
    %v608 = vmin.f32 %v600, 3.4028235e+38
    %v609 = vmin.f32 %v601, 3.4028235e+38
    %610 = vst [vmem:[%s7] sm:$0xff] %v602
    %611 = vst [vmem:[%s7 + $0x18] sm:$0xff] %v603
    %612 = vst [vmem:[%s7 + $0x30] sm:$0xff] %v604
    %613 = vst [vmem:[%s7 + $0x48] sm:$0xff] %v605
    %614 = vst [vmem:[%s7 + $0x60] sm:$0xff] %v606
    %615 = vst [vmem:[%s7 + $0x78] sm:$0xff] %v607
    %616 = vst [vmem:[%s7 + $0x90] sm:$0xff] %v608
    %617 = vst [vmem:[%s7 + $0xa8] sm:$0xff] %v609
    %s618 = sld [smem:[#allocation4 + $0x80]]
    %v619 = vld [vmem:[%s6] sm:$0xff]
    %v620 = vld [vmem:[%s6 + $0x18] sm:$0xff]
    %v621 = vld [vmem:[%s6 + $0x30] sm:$0xff]
    %v622 = vld [vmem:[%s6 + $0x48] sm:$0xff]
    %v623 = vld [vmem:[%s6 + $0x60] sm:$0xff]
    %v624 = vld [vmem:[%s6 + $0x78] sm:$0xff]
    %v625 = vld [vmem:[%s6 + $0x90] sm:$0xff]
    %v626 = vld [vmem:[%s6 + $0xa8] sm:$0xff]
    %v627 = vstv %s618
    %v628 = vmul.f32 %v627, %v619
    %v629 = vmul.f32 %v627, %v620
    %v630 = vmul.f32 %v627, %v621
    %v631 = vmul.f32 %v627, %v622
    %v632 = vmul.f32 %v627, %v623
    %v633 = vmul.f32 %v627, %v624
    %v634 = vmul.f32 %v627, %v625
    %v635 = vmul.f32 %v627, %v626
    %s636 = sld [smem:[#allocation4 + $0x81]]
    %v637 = vld [vmem:[%s6 + $0x8] sm:$0xff]
    %v638 = vld [vmem:[%s6 + $0x20] sm:$0xff]
    %v639 = vld [vmem:[%s6 + $0x38] sm:$0xff]
    %v640 = vld [vmem:[%s6 + $0x50] sm:$0xff]
    %v641 = vld [vmem:[%s6 + $0x68] sm:$0xff]
    %v642 = vld [vmem:[%s6 + $0x80] sm:$0xff]
    %v643 = vld [vmem:[%s6 + $0x98] sm:$0xff]
    %v644 = vld [vmem:[%s6 + $0xb0] sm:$0xff]
    %v645 = vstv %s636
    %v646 = vmul.f32 %v645, %v637
    %v647 = vmul.f32 %v645, %v638
    %v648 = vmul.f32 %v645, %v639
    %v649 = vmul.f32 %v645, %v640
    %v650 = vmul.f32 %v645, %v641
    %v651 = vmul.f32 %v645, %v642
    %v652 = vmul.f32 %v645, %v643
    %v653 = vmul.f32 %v645, %v644
    %v654 = vadd.f32 %v628, %v646
    %v655 = vadd.f32 %v629, %v647
    %v656 = vadd.f32 %v630, %v648
    %v657 = vadd.f32 %v631, %v649
    %v658 = vadd.f32 %v632, %v650
    %v659 = vadd.f32 %v633, %v651
    %v660 = vadd.f32 %v634, %v652
    %v661 = vadd.f32 %v635, %v653
    %s662 = sld [smem:[#allocation4 + $0x82]]
    %v663 = vld [vmem:[%s6 + $0x10] sm:$0xff]
    %v664 = vld [vmem:[%s6 + $0x28] sm:$0xff]
    %v665 = vld [vmem:[%s6 + $0x40] sm:$0xff]
    %v666 = vld [vmem:[%s6 + $0x58] sm:$0xff]
    %v667 = vld [vmem:[%s6 + $0x70] sm:$0xff]
    %v668 = vld [vmem:[%s6 + $0x88] sm:$0xff]
    %v669 = vld [vmem:[%s6 + $0xa0] sm:$0xff]
    %v670 = vld [vmem:[%s6 + $0xb8] sm:$0xff]
    %v671 = vstv %s662
    %v672 = vmul.f32 %v671, %v663
    %v673 = vmul.f32 %v671, %v664
    %v674 = vmul.f32 %v671, %v665
    %v675 = vmul.f32 %v671, %v666
    %v676 = vmul.f32 %v671, %v667
    %v677 = vmul.f32 %v671, %v668
    %v678 = vmul.f32 %v671, %v669
    %v679 = vmul.f32 %v671, %v670
    %v680 = vadd.f32 %v654, %v672
    %v681 = vadd.f32 %v655, %v673
    %v682 = vadd.f32 %v656, %v674
    %v683 = vadd.f32 %v657, %v675
    %v684 = vadd.f32 %v658, %v676
    %v685 = vadd.f32 %v659, %v677
    %v686 = vadd.f32 %v660, %v678
    %v687 = vadd.f32 %v661, %v679
    %v688 = vmul.f32 %v529, %v680
    %v689 = vmul.f32 %v529, %v681
    %v690 = vmul.f32 %v529, %v682
    %v691 = vmul.f32 %v529, %v683
    %v692 = vmul.f32 %v529, %v684
    %v693 = vmul.f32 %v529, %v685
    %v694 = vmul.f32 %v529, %v686
    %v695 = vmul.f32 %v529, %v687
    %v696 = vadd.f32 %v358, %v688
    %v697 = vadd.f32 %v362, %v689
    %v698 = vadd.f32 %v368, %v690
    %v699 = vadd.f32 %v372, %v691
    %v700 = vadd.f32 %v378, %v692
    %v701 = vadd.f32 %v382, %v693
    %v702 = vadd.f32 %v388, %v694
    %v703 = vadd.f32 %v392, %v695
    %v704 = vmul.f32 %v546, %v637
    %v705 = vmul.f32 %v546, %v638
    %v706 = vmul.f32 %v546, %v639
    %v707 = vmul.f32 %v546, %v640
    %v708 = vmul.f32 %v546, %v641
    %v709 = vmul.f32 %v546, %v642
    %v710 = vmul.f32 %v546, %v643
    %v711 = vmul.f32 %v546, %v644
    %v712 = vsub.f32 %v696, %v704
    %v713 = vsub.f32 %v697, %v705
    %v714 = vsub.f32 %v698, %v706
    %v715 = vsub.f32 %v699, %v707
    %v716 = vsub.f32 %v700, %v708
    %v717 = vsub.f32 %v701, %v709
    %v718 = vsub.f32 %v702, %v710
    %v719 = vsub.f32 %v703, %v711
    %v720 = vld [vmem:[%s2 + $0x1] sm:$0x1]
    %v722 = vlaneseq
    %v723 = vshrl.u32 %v722, 7
    %v724 = vsub.s32 0, %v723
    %v725 = vrot.slane %v720, %v724
    %v727 = vadd.f32 %v712, %v725
    %v728 = vadd.f32 %v713, %v725
    %v729 = vadd.f32 %v714, %v725
    %v730 = vadd.f32 %v715, %v725
    %v731 = vadd.f32 %v716, %v725
    %v732 = vadd.f32 %v717, %v725
    %v733 = vadd.f32 %v718, %v725
    %v734 = vadd.f32 %v719, %v725
    %vm735 = vcmp.ne.f32.partialorder %v727, %v727
    %vm736 = vcmp.ne.f32.partialorder %v728, %v728
    %vm737 = vcmp.ne.f32.partialorder %v729, %v729
    %vm738 = vcmp.ne.f32.partialorder %v730, %v730
    %vm739 = vcmp.ne.f32.partialorder %v731, %v731
    %vm740 = vcmp.ne.f32.partialorder %v732, %v732
    %vm741 = vcmp.ne.f32.partialorder %v733, %v733
    %vm742 = vcmp.ne.f32.partialorder %v734, %v734
    %v743 = vsel %vm735, 0.0, %v727
    %v744 = vsel %vm736, 0.0, %v728
    %v745 = vsel %vm737, 0.0, %v729
    %v746 = vsel %vm738, 0.0, %v730
    %v747 = vsel %vm739, 0.0, %v731
    %v748 = vsel %vm740, 0.0, %v732
    %v749 = vsel %vm741, 0.0, %v733
    %v750 = vsel %vm742, 0.0, %v734
    %v751 = vmax.f32 %v743, -3.4028235e+38
    %v752 = vmax.f32 %v744, -3.4028235e+38
    %v753 = vmax.f32 %v745, -3.4028235e+38
    %v754 = vmax.f32 %v746, -3.4028235e+38
    %v755 = vmax.f32 %v747, -3.4028235e+38
    %v756 = vmax.f32 %v748, -3.4028235e+38
    %v757 = vmax.f32 %v749, -3.4028235e+38
    %v758 = vmax.f32 %v750, -3.4028235e+38
    %v759 = vmin.f32 %v751, 3.4028235e+38
    %v760 = vmin.f32 %v752, 3.4028235e+38
    %v761 = vmin.f32 %v753, 3.4028235e+38
    %v762 = vmin.f32 %v754, 3.4028235e+38
    %v763 = vmin.f32 %v755, 3.4028235e+38
    %v764 = vmin.f32 %v756, 3.4028235e+38
    %v765 = vmin.f32 %v757, 3.4028235e+38
    %v766 = vmin.f32 %v758, 3.4028235e+38
    %767 = vst [vmem:[%s7 + $0x8] sm:$0xff] %v759
    %768 = vst [vmem:[%s7 + $0x20] sm:$0xff] %v760
    %769 = vst [vmem:[%s7 + $0x38] sm:$0xff] %v761
    %770 = vst [vmem:[%s7 + $0x50] sm:$0xff] %v762
    %771 = vst [vmem:[%s7 + $0x68] sm:$0xff] %v763
    %772 = vst [vmem:[%s7 + $0x80] sm:$0xff] %v764
    %773 = vst [vmem:[%s7 + $0x98] sm:$0xff] %v765
    %774 = vst [vmem:[%s7 + $0xb0] sm:$0xff] %v766
    %s775 = sld [smem:[#allocation4 + $0x100]]
    %v776 = vld [vmem:[%s6] sm:$0xff]
    %v777 = vld [vmem:[%s6 + $0x18] sm:$0xff]
    %v778 = vld [vmem:[%s6 + $0x30] sm:$0xff]
    %v779 = vld [vmem:[%s6 + $0x48] sm:$0xff]
    %v780 = vld [vmem:[%s6 + $0x60] sm:$0xff]
    %v781 = vld [vmem:[%s6 + $0x78] sm:$0xff]
    %v782 = vld [vmem:[%s6 + $0x90] sm:$0xff]
    %v783 = vld [vmem:[%s6 + $0xa8] sm:$0xff]
    %v784 = vstv %s775
    %v785 = vmul.f32 %v784, %v776
    %v786 = vmul.f32 %v784, %v777
    %v787 = vmul.f32 %v784, %v778
    %v788 = vmul.f32 %v784, %v779
    %v789 = vmul.f32 %v784, %v780
    %v790 = vmul.f32 %v784, %v781
    %v791 = vmul.f32 %v784, %v782
    %v792 = vmul.f32 %v784, %v783
    %s793 = sld [smem:[#allocation4 + $0x101]]
    %v794 = vld [vmem:[%s6 + $0x8] sm:$0xff]
    %v795 = vld [vmem:[%s6 + $0x20] sm:$0xff]
    %v796 = vld [vmem:[%s6 + $0x38] sm:$0xff]
    %v797 = vld [vmem:[%s6 + $0x50] sm:$0xff]
    %v798 = vld [vmem:[%s6 + $0x68] sm:$0xff]
    %v799 = vld [vmem:[%s6 + $0x80] sm:$0xff]
    %v800 = vld [vmem:[%s6 + $0x98] sm:$0xff]
    %v801 = vld [vmem:[%s6 + $0xb0] sm:$0xff]
    %v802 = vstv %s793
    %v803 = vmul.f32 %v802, %v794
    %v804 = vmul.f32 %v802, %v795
    %v805 = vmul.f32 %v802, %v796
    %v806 = vmul.f32 %v802, %v797
    %v807 = vmul.f32 %v802, %v798
    %v808 = vmul.f32 %v802, %v799
    %v809 = vmul.f32 %v802, %v800
    %v810 = vmul.f32 %v802, %v801
    %v811 = vadd.f32 %v785, %v803
    %v812 = vadd.f32 %v786, %v804
    %v813 = vadd.f32 %v787, %v805
    %v814 = vadd.f32 %v788, %v806
    %v815 = vadd.f32 %v789, %v807
    %v816 = vadd.f32 %v790, %v808
    %v817 = vadd.f32 %v791, %v809
    %v818 = vadd.f32 %v792, %v810
    %s819 = sld [smem:[#allocation4 + $0x102]]
    %v820 = vld [vmem:[%s6 + $0x10] sm:$0xff]
    %v821 = vld [vmem:[%s6 + $0x28] sm:$0xff]
    %v822 = vld [vmem:[%s6 + $0x40] sm:$0xff]
    %v823 = vld [vmem:[%s6 + $0x58] sm:$0xff]
    %v824 = vld [vmem:[%s6 + $0x70] sm:$0xff]
    %v825 = vld [vmem:[%s6 + $0x88] sm:$0xff]
    %v826 = vld [vmem:[%s6 + $0xa0] sm:$0xff]
    %v827 = vld [vmem:[%s6 + $0xb8] sm:$0xff]
    %v828 = vstv %s819
    %v829 = vmul.f32 %v828, %v820
    %v830 = vmul.f32 %v828, %v821
    %v831 = vmul.f32 %v828, %v822
    %v832 = vmul.f32 %v828, %v823
    %v833 = vmul.f32 %v828, %v824
    %v834 = vmul.f32 %v828, %v825
    %v835 = vmul.f32 %v828, %v826
    %v836 = vmul.f32 %v828, %v827
    %v837 = vadd.f32 %v811, %v829
    %v838 = vadd.f32 %v812, %v830
    %v839 = vadd.f32 %v813, %v831
    %v840 = vadd.f32 %v814, %v832
    %v841 = vadd.f32 %v815, %v833
    %v842 = vadd.f32 %v816, %v834
    %v843 = vadd.f32 %v817, %v835
    %v844 = vadd.f32 %v818, %v836
    %v845 = vmul.f32 %v529, %v837
    %v846 = vmul.f32 %v529, %v838
    %v847 = vmul.f32 %v529, %v839
    %v848 = vmul.f32 %v529, %v840
    %v849 = vmul.f32 %v529, %v841
    %v850 = vmul.f32 %v529, %v842
    %v851 = vmul.f32 %v529, %v843
    %v852 = vmul.f32 %v529, %v844
    %v853 = vadd.f32 %v429, %v845
    %v854 = vadd.f32 %v432, %v846
    %v855 = vadd.f32 %v437, %v847
    %v856 = vadd.f32 %v440, %v848
    %v857 = vadd.f32 %v445, %v849
    %v858 = vadd.f32 %v448, %v850
    %v859 = vadd.f32 %v453, %v851
    %v860 = vadd.f32 %v456, %v852
    %v861 = vmul.f32 %v546, %v820
    %v862 = vmul.f32 %v546, %v821
    %v863 = vmul.f32 %v546, %v822
    %v864 = vmul.f32 %v546, %v823
    %v865 = vmul.f32 %v546, %v824
    %v866 = vmul.f32 %v546, %v825
    %v867 = vmul.f32 %v546, %v826
    %v868 = vmul.f32 %v546, %v827
    %v869 = vsub.f32 %v853, %v861
    %v870 = vsub.f32 %v854, %v862
    %v871 = vsub.f32 %v855, %v863
    %v872 = vsub.f32 %v856, %v864
    %v873 = vsub.f32 %v857, %v865
    %v874 = vsub.f32 %v858, %v866
    %v875 = vsub.f32 %v859, %v867
    %v876 = vsub.f32 %v860, %v868
    %v877 = vld [vmem:[%s2 + $0x2] sm:$0x1]
    %v879 = vlaneseq
    %v880 = vshrl.u32 %v879, 7
    %v881 = vsub.s32 0, %v880
    %v882 = vrot.slane %v877, %v881
    %v884 = vadd.f32 %v869, %v882
    %v885 = vadd.f32 %v870, %v882
    %v886 = vadd.f32 %v871, %v882
    %v887 = vadd.f32 %v872, %v882
    %v888 = vadd.f32 %v873, %v882
    %v889 = vadd.f32 %v874, %v882
    %v890 = vadd.f32 %v875, %v882
    %v891 = vadd.f32 %v876, %v882
    %vm892 = vcmp.ne.f32.partialorder %v884, %v884
    %vm893 = vcmp.ne.f32.partialorder %v885, %v885
    %vm894 = vcmp.ne.f32.partialorder %v886, %v886
    %vm895 = vcmp.ne.f32.partialorder %v887, %v887
    %vm896 = vcmp.ne.f32.partialorder %v888, %v888
    %vm897 = vcmp.ne.f32.partialorder %v889, %v889
    %vm898 = vcmp.ne.f32.partialorder %v890, %v890
    %vm899 = vcmp.ne.f32.partialorder %v891, %v891
    %v900 = vsel %vm892, 0.0, %v884
    %v901 = vsel %vm893, 0.0, %v885
    %v902 = vsel %vm894, 0.0, %v886
    %v903 = vsel %vm895, 0.0, %v887
    %v904 = vsel %vm896, 0.0, %v888
    %v905 = vsel %vm897, 0.0, %v889
    %v906 = vsel %vm898, 0.0, %v890
    %v907 = vsel %vm899, 0.0, %v891
    %v908 = vmax.f32 %v900, -3.4028235e+38
    %v909 = vmax.f32 %v901, -3.4028235e+38
    %v910 = vmax.f32 %v902, -3.4028235e+38
    %v911 = vmax.f32 %v903, -3.4028235e+38
    %v912 = vmax.f32 %v904, -3.4028235e+38
    %v913 = vmax.f32 %v905, -3.4028235e+38
    %v914 = vmax.f32 %v906, -3.4028235e+38
    %v915 = vmax.f32 %v907, -3.4028235e+38
    %v916 = vmin.f32 %v908, 3.4028235e+38
    %v917 = vmin.f32 %v909, 3.4028235e+38
    %v918 = vmin.f32 %v910, 3.4028235e+38
    %v919 = vmin.f32 %v911, 3.4028235e+38
    %v920 = vmin.f32 %v912, 3.4028235e+38
    %v921 = vmin.f32 %v913, 3.4028235e+38
    %v922 = vmin.f32 %v914, 3.4028235e+38
    %v923 = vmin.f32 %v915, 3.4028235e+38
    %924 = vst [vmem:[%s7 + $0x10] sm:$0xff] %v916
    %925 = vst [vmem:[%s7 + $0x28] sm:$0xff] %v917
    %926 = vst [vmem:[%s7 + $0x40] sm:$0xff] %v918
    %927 = vst [vmem:[%s7 + $0x58] sm:$0xff] %v919
    %928 = vst [vmem:[%s7 + $0x70] sm:$0xff] %v920
    %929 = vst [vmem:[%s7 + $0x88] sm:$0xff] %v921
    %930 = vst [vmem:[%s7 + $0xa0] sm:$0xff] %v922
    %931 = vst [vmem:[%s7 + $0xb8] sm:$0xff] %v923
    // Predicated region
    $region38: #{_train_step_impl.1} parent=1 // pred_check
      _
    $region39: #{_train_step_impl.1} parent=1 // pred_check_branch
      %933 = sbr.rel (0) target = $region41
    $region40: #{_train_step_impl.1} parent=1 // pred_region
      _
    $region41: #{_train_step_impl.1} parent=1 // pred_fallthru
      _
    // Predicated region
    $region42: #{_train_step_impl.1} parent=1 // pred_check
      _
    $region43: #{_train_step_impl.1} parent=1 // pred_check_branch
      %935 = sbr.rel (0) target = $region45
    $region44: #{_train_step_impl.1} parent=1 // pred_region
      _
    $region45: #{_train_step_impl.1} parent=1 // pred_fallthru
      _
    %936 = vsyncpa [#allocation3], 1
    %937 = vsyncpa [#allocation5], 1

</llo_original>
